<compile_context>
chip_gen: v7x
topology: tpu7x:2x2x1
jax: 0.10.0
libtpu: 0.0.40
codegen_flags: <defaults>
</compile_context>

<pallas_src>
import functools
import math
from fractions import Fraction

import numpy as np
import jax
import jax.numpy as jnp
from jax.experimental import pallas as pl
from jax.experimental.pallas import tpu as pltpu


# ----------------------------------------------------------------------------
# Host-side: exact associated-Legendre polynomial coefficients (e3nn flavour).
#   P(l,m)(z,y) = norm * 1/(2^l l!) * y^|m| * d^{l+|m|}/dz^{l+|m|} (z^2 - 1)^l
#   norm = sqrt((2l+1)/(4*pi) * (l-|m|)!/(l+|m|)!), z = cos(beta), y = sin(beta)
# Returns {(z_power, y_power): float_coefficient};  y_power is always |m|.
# ----------------------------------------------------------------------------
def _legendre_poly_coeffs(l: int, m: int):
    m = abs(m)
    coeffs = {}
    for k in range((l + m + 1) // 2, l + 1):
        zdeg = 2 * k - (l + m)
        if zdeg < 0:
            continue
        c = Fraction(math.comb(l, k)) * ((-1) ** (l - k))
        c *= Fraction(math.factorial(2 * k), math.factorial(zdeg))
        c /= Fraction(2 ** l * math.factorial(l))
        coeffs[(zdeg, m)] = coeffs.get((zdeg, m), Fraction(0)) + c
    norm = math.sqrt((2 * l + 1) / (4 * math.pi)
                     * math.factorial(l - m) / math.factorial(l + m))
    return {key: float(v) * norm for key, v in coeffs.items()}


# ----------------------------------------------------------------------------
# Pallas kernel.
#   ab_ref : (TN, 2k)     packed rows: [alpha_0..alpha_{k-1}, beta_0..beta_{k-1}]
#   s_ref  : (12k, 4L)    bf16 0/1 lane-expansion matrix (3 copies stacked along K
#                         for the hi/mid/lo bf16 terms;  L = k*D_pad)
#   cz_ref : (lmax+1, L)  coeff of cos(beta)^zp per output lane (sqrt2 & norm folded)
#   mk_ref : (lmax+2, L)  row 0: [m==0]; row 1: [m>0]; row q+1: [|m|==q]
#   out    : (TN, L)      out[r, j*D_pad+d] = Y_d(alpha[r*k+j], beta[r*k+j])
# ----------------------------------------------------------------------------
def _sh_kernel(lmax, ab_ref, s_ref, cz_ref, mk_ref, out_ref):
    L = out_ref.shape[-1]

    # One transcendental pass: cos over [alpha | beta | alpha-pi/2 | beta-pi/2]
    # gives cos(a), cos(b), sin(a), sin(b) for the whole packed tile.
    ab = ab_ref[...]                                        # (TN, 2k) f32
    ab4 = jnp.concatenate([ab, ab - (math.pi / 2)], axis=-1)
    cs = jnp.cos(ab4)                                       # (TN, 4k) f32

    # Exact-by-construction lane expansion on the MXU: split the f32 trig
    # values into three bf16 terms (t0+t1+t2 == cs to ~f32 accuracy) and
    # contract against the 0/1 replication matrix with ONE bf16 matmul,
    # accumulated in f32.  Pass count is now independent of the default
    # f32 matmul precision.
    t0 = cs.astype(jnp.bfloat16).astype(jnp.float32)
    r1 = cs - t0
    t1 = r1.astype(jnp.bfloat16).astype(jnp.float32)
    r2 = r1 - t1
    lhs = jnp.concatenate([cs, r1, r2], axis=-1).astype(jnp.bfloat16)    # (TN, 12k)
    exp = jnp.dot(lhs, s_ref[...], preferred_element_type=jnp.float32)   # (TN, 4L)

    ca, cb = exp[:, 0 * L:1 * L], exp[:, 1 * L:2 * L]       # cos(alpha), cos(beta)
    sa, sb = exp[:, 2 * L:3 * L], exp[:, 3 * L:4 * L]       # sin(alpha), sin(beta)

    # Associated-Legendre part: per output lane only powers of cos(beta) remain
    # (sin(beta)^|m| is folded into `g` below; sqrt2/normalization folded into cz).
    legpoly = jnp.broadcast_to(cz_ref[lmax:lmax + 1, :], cb.shape)
    for zp in range(lmax - 1, -1, -1):
        legpoly = legpoly * cb + cz_ref[zp:zp + 1, :]

    # Azimuthal factor times sin(beta)^|m|:
    #   g = [m==0] + sum_q sin(b)^q * [|m|==q] * (cos(q a) if m>0 else sin(q a))
    # cos/sin(q*alpha) via Chebyshev recurrence -> no extra transcendentals.
    g = jnp.broadcast_to(mk_ref[0:1, :], cb.shape)
    if lmax >= 1:
        pos = jnp.broadcast_to(mk_ref[1:2, :], cb.shape) > 0.5   # hoisted bool mask
        cq, sq, sbq = ca, sa, sb
        for q in range(1, lmax + 1):
            g = g + (sbq * mk_ref[q + 1:q + 2, :]) * jnp.where(pos, cq, sq)
            if q < lmax:
                cq, sq = cq * ca - sq * sa, sq * ca + cq * sa
                sbq = sbq * sb

    out_ref[...] = (legpoly * g).astype(out_ref.dtype)


# ----------------------------------------------------------------------------
# Module wrapper (mirrors e3nn.o3.SphericalHarmonicsAlphaBeta.forward).
# ----------------------------------------------------------------------------
class SphericalHarmonicsAlphaBeta:
    def __init__(self, l, normalization: str = "integral"):
        ls = [l] if isinstance(l, int) else list(l)
        self.ls = ls
        self.lmax = lmax = max(ls)
        self.dim = D = sum(2 * li + 1 for li in ls)
        self.normalization = normalization

        # Lane-pad D so the output is always lane-dense: D_pad is the next
        # divisor of 128 (or the next multiple of 128 for very large D); the
        # extra columns carry zero coefficients and are dropped in the wrapper.
        if D <= 128:
            D_pad = next(d for d in (1, 2, 4, 8, 16, 32, 64, 128) if d >= D)
            k = 128 // D_pad
        else:
            D_pad = -(-D // 128) * 128
            k = 1
        self.D_pad, self.k = D_pad, k
        self.L = L = k * D_pad

        sqrt2 = math.sqrt(2.0)
        cz = np.zeros((lmax + 1, D_pad), np.float64)   # coeff of cos(beta)^zp per column
        mk = np.zeros((lmax + 2, D_pad), np.float64)   # selection rows (see kernel doc)
        j = 0
        for li in ls:
            if normalization == "norm":
                scale = 1.0 / (math.sqrt(2 * li + 1) / math.sqrt(4 * math.pi))
            elif normalization == "component":
                scale = math.sqrt(4 * math.pi)
            else:  # 'integral'
                scale = 1.0
            for m in range(-li, li + 1):
                col_scale = scale * (sqrt2 if m != 0 else 1.0)   # fold sqrt2 into cz
                for (zp, yp), c in _legendre_poly_coeffs(li, m).items():
                    assert yp == abs(m)
                    cz[zp, j] += c * col_scale
                q = abs(m)
                if m == 0:
                    mk[0, j] = 1.0
                else:
                    if m > 0:
                        mk[1, j] = 1.0
                    mk[q + 1, j] = 1.0
                j += 1
        assert j == D

        # Constants tiled k times along lanes (one copy per packed sub-row).
        self.cz = jnp.asarray(np.tile(cz, (1, k)).astype(np.float32))   # (lmax+1, L)
        self.mk = jnp.asarray(np.tile(mk, (1, k)).astype(np.float32))   # (lmax+2, L)

        # 0/1 lane-expansion matrix for the fused bf16 matmul.
        #   LHS columns: [cos a | cos b | sin a | sin b] x {hi, mid, lo} terms.
        #   Output columns: [ca expanded | cb expanded | sa expanded | sb expanded].
        s4 = np.zeros((4 * k, 4 * L), np.float32)
        for sec in range(4):
            for jj in range(k):
                row = sec * k + jj
                col0 = sec * L + jj * D_pad
                s4[row, col0:col0 + D_pad] = 1.0
        s = np.concatenate([s4, s4, s4], axis=0)                        # (12k, 4L)
        self.s = jnp.asarray(s, dtype=jnp.bfloat16)                     # exact 0/1

    def __call__(self, alpha: jnp.ndarray, beta: jnp.ndarray) -> jnp.ndarray:
        assert alpha.shape == beta.shape
        orig_shape = alpha.shape
        a = jnp.ravel(alpha).astype(jnp.float32)
        b = jnp.ravel(beta).astype(jnp.float32)
        n = int(a.shape[0])
        k, D, D_pad, L, lmax = self.k, self.dim, self.D_pad, self.L, self.lmax

        # Packed rows (k logical samples each).
        R = max(1, -(-n // k))

        # Tile choice: big tiles (up to ~2048 rows for L=128) to amortize the
        # ~0.35us/step overhead; larger inputs use an EVEN number of grid
        # steps so the "parallel" axis splits evenly across v7x's two TCs.
        TN_cap = max(64, (2048 * 128) // L)
        if R <= 512:
            steps = 1
        else:
            steps = -(-R // TN_cap)
            steps += steps % 2
            steps = max(steps, 2)
        TN = max(8, ((-(-R // steps)) + 7) // 8 * 8)
        R_pad = TN * steps
        n_pad = R_pad * k
        if n_pad != n:
            a = jnp.pad(a, (0, n_pad - n))
            b = jnp.pad(b, (0, n_pad - n))
        ab = jnp.concatenate([a.reshape(R_pad, k), b.reshape(R_pad, k)], axis=1)  # (R_pad, 2k)

        out = pl.pallas_call(
            functools.partial(_sh_kernel, lmax),
            out_shape=jax.ShapeDtypeStruct((R_pad, L), jnp.float32),
            grid_spec=pltpu.PrefetchScalarGridSpec(
                num_scalar_prefetch=0,
                grid=(steps,),
                in_specs=[
                    pl.BlockSpec((TN, 2 * k), lambda i: (i, 0)),         # fused alpha|beta
                    pl.BlockSpec((12 * k, 4 * L), lambda i: (0, 0)),     # bf16 expansion matrix
                    pl.BlockSpec((lmax + 1, L), lambda i: (0, 0)),       # Legendre coeff rows
                    pl.BlockSpec((lmax + 2, L), lambda i: (0, 0)),       # selection masks
                ],
                out_specs=pl.BlockSpec((TN, L), lambda i: (i, 0)),
            ),
            compiler_params=pltpu.CompilerParams(
                dimension_semantics=("parallel",),
                vmem_limit_bytes=48 * 1024 * 1024),
        )(ab, self.s, self.cz, self.mk)

        out = out.reshape(R_pad * k, D_pad)[:n, :D]
        return out.reshape(orig_shape + (D,))


# ----------------------------------------------------------------------------
# Pure-JAX reference: straightforward per-column formulation (explicit
# monomials and per-column sin(|m|a)/cos(|m|a)) -- structurally different from
# the kernel's Horner/Chebyshev/packed-lane path, so it checks the math, not
# just the Pallas plumbing.
# ----------------------------------------------------------------------------
def _reference(alpha, beta, ls, normalization):
    a = jnp.ravel(alpha).astype(jnp.float32)
    b = jnp.ravel(beta).astype(jnp.float32)
    cb, sb = jnp.cos(b), jnp.sin(b)
    cols = []
    for l in ls:
        if normalization == "norm":
            scale = 1.0 / (math.sqrt(2 * l + 1) / math.sqrt(4 * math.pi))
        elif normalization == "component":
            scale = math.sqrt(4 * math.pi)
        else:
            scale = 1.0
        for m in range(-l, l + 1):
            leg = jnp.zeros_like(b)
            for (zp, yp), c in _legendre_poly_coeffs(l, m).items():
                leg = leg + c * cb ** zp * sb ** yp
            if m < 0:
                fac = math.sqrt(2.0) * jnp.sin(abs(m) * a)
            elif m > 0:
                fac = math.sqrt(2.0) * jnp.cos(m * a)
            else:
                fac = jnp.ones_like(a)
            cols.append(scale * leg * fac)
    out = jnp.stack(cols, axis=-1)
    return out.reshape(alpha.shape + (out.shape[-1],))


if __name__ == "__main__":
    # ls like Irreps "1x0e+1x1o+1x2e+1x3o" -> output dim 1+3+5+7 = 16
    module = SphericalHarmonicsAlphaBeta([0, 1, 2, 3], normalization="integral")

    key = jax.random.PRNGKey(0)
    k1, k2 = jax.random.split(key)
    alpha = jax.random.uniform(k1, (2, 16), jnp.float32,
                               minval=-math.pi, maxval=math.pi)
    beta = jax.random.uniform(k2, (2, 16), jnp.float32,
                              minval=0.0, maxval=math.pi)

    out = jax.block_until_ready(module(alpha, beta))
    assert out.shape == (2, 16, module.dim), out.shape

    ref = _reference(alpha, beta, module.ls, "integral")
    np.testing.assert_allclose(np.asarray(out), np.asarray(ref),
                               rtol=2e-5, atol=2e-5)

    # Independent spot-check against closed forms (e3nn conventions, l=0 and l=1).
    a_np, b_np = np.asarray(alpha), np.asarray(beta)
    c0 = math.sqrt(1.0 / (4 * math.pi))
    c1 = math.sqrt(3.0 / (4 * math.pi))
    np.testing.assert_allclose(np.asarray(out[..., 0]), c0, rtol=1e-5, atol=1e-5)
    exp_l1 = np.stack([c1 * np.sin(b_np) * np.sin(a_np),
                       c1 * np.cos(b_np),
                       c1 * np.sin(b_np) * np.cos(a_np)], axis=-1)
    np.testing.assert_allclose(np.asarray(out[..., 1:4]), exp_l1,
                               rtol=1e-5, atol=1e-5)
    print("KERNEL_OK")
</pallas_src>

<mosaic_0001>
module attributes {stable_mosaic.version = 11 : i64} {
  func.func @_sh_kernel(%arg0: i32, %arg1: memref<8x16xf32, #tpu.memory_space<vmem>>, %arg2: memref<96x512xbf16, #tpu.memory_space<vmem>>, %arg3: memref<4x128xf32, #tpu.memory_space<vmem>>, %arg4: memref<5x128xf32, #tpu.memory_space<vmem>>, %arg5: memref<8x128xf32, #tpu.memory_space<vmem>>) attributes {dimension_semantics = [#tpu.dimension_semantics<parallel>], iteration_bounds = array<i64: 1>, scalar_prefetch = 0 : i64, scratch_operands = 0 : i64, tpu.core_type = #tpu.core_type<tc>, window_params = [{transform_indices = @transform_0, window_bounds = array<i64: 8, 16>}, {pipeline_mode = #tpu.pipeline_mode<synchronous>, transform_indices = @transform_1, window_bounds = array<i64: 96, 512>}, {pipeline_mode = #tpu.pipeline_mode<synchronous>, transform_indices = @transform_2, window_bounds = array<i64: 4, 128>}, {pipeline_mode = #tpu.pipeline_mode<synchronous>, transform_indices = @transform_3, window_bounds = array<i64: 5, 128>}, {transform_indices = @transform_4, window_bounds = array<i64: 8, 128>}]} {
    %c0 = arith.constant 0 : index
    %c0_0 = arith.constant 0 : index
    %0 = vector.load %arg1[%c0, %c0_0] : memref<8x16xf32, #tpu.memory_space<vmem>>, vector<8x16xf32>
    %cst = arith.constant 1.57079637 : f32
    %1 = vector.broadcast %cst : f32 to vector<8x16xf32>
    %2 = arith.subf %0, %1 : vector<8x16xf32>
    %3 = tpu.concatenate %0, %2 in 1 : vector<8x16xf32>, vector<8x16xf32> -> vector<8x32xf32>
    %4 = math.cos %3 : vector<8x32xf32>
    %5 = arith.truncf %4 : vector<8x32xf32> to vector<8x32xbf16>
    %6 = arith.extf %5 : vector<8x32xbf16> to vector<8x32xf32>
    %7 = arith.subf %4, %6 : vector<8x32xf32>
    %8 = arith.truncf %7 : vector<8x32xf32> to vector<8x32xbf16>
    %9 = arith.extf %8 : vector<8x32xbf16> to vector<8x32xf32>
    %10 = arith.subf %7, %9 : vector<8x32xf32>
    %11 = tpu.concatenate %4, %7, %10 in 1 : vector<8x32xf32>, vector<8x32xf32>, vector<8x32xf32> -> vector<8x96xf32>
    %12 = arith.truncf %11 : vector<8x96xf32> to vector<8x96xbf16>
    %c0_1 = arith.constant 0 : index
    %c0_2 = arith.constant 0 : index
    %13 = vector.load %arg2[%c0_1, %c0_2] : memref<96x512xbf16, #tpu.memory_space<vmem>>, vector<96x512xbf16>
    %cst_3 = arith.constant dense<0.000000e+00> : vector<8x512xf32>
    %14 = tpu.matmul %12, %13, %cst_3 {dimension_numbers = #tpu.dot_dimension_numbers<[1], [0], [0], [1], [0, 0, 1, 1], [], []>} : vector<8x96xbf16>, vector<96x512xbf16>, vector<8x512xf32> -> vector<8x512xf32>
    %15 = vector.extract_strided_slice %14 {offsets = [0, 0], sizes = [8, 128], strides = [1, 1]} : vector<8x512xf32> to vector<8x128xf32>
    %16 = vector.extract_strided_slice %14 {offsets = [0, 128], sizes = [8, 128], strides = [1, 1]} : vector<8x512xf32> to vector<8x128xf32>
    %17 = vector.extract_strided_slice %14 {offsets = [0, 256], sizes = [8, 128], strides = [1, 1]} : vector<8x512xf32> to vector<8x128xf32>
    %18 = vector.extract_strided_slice %14 {offsets = [0, 384], sizes = [8, 128], strides = [1, 1]} : vector<8x512xf32> to vector<8x128xf32>
    %c3 = arith.constant 3 : index
    %c0_4 = arith.constant 0 : index
    %19 = vector.load %arg3[%c3, %c0_4] : memref<4x128xf32, #tpu.memory_space<vmem>>, vector<1x128xf32>
    %20 = vector.shape_cast %19 : vector<1x128xf32> to vector<1x128xf32>
    %21 = vector.broadcast %20 : vector<1x128xf32> to vector<8x128xf32>
    %22 = arith.mulf %21, %16 : vector<8x128xf32>
    %c2 = arith.constant 2 : index
    %c0_5 = arith.constant 0 : index
    %23 = vector.load %arg3[%c2, %c0_5] : memref<4x128xf32, #tpu.memory_space<vmem>>, vector<1x128xf32>
    %24 = vector.broadcast %23 : vector<1x128xf32> to vector<8x128xf32>
    %25 = arith.addf %22, %24 : vector<8x128xf32>
    %26 = arith.mulf %25, %16 : vector<8x128xf32>
    %c1 = arith.constant 1 : index
    %c0_6 = arith.constant 0 : index
    %27 = vector.load %arg3[%c1, %c0_6] : memref<4x128xf32, #tpu.memory_space<vmem>>, vector<1x128xf32>
    %28 = vector.broadcast %27 : vector<1x128xf32> to vector<8x128xf32>
    %29 = arith.addf %26, %28 : vector<8x128xf32>
    %30 = arith.mulf %29, %16 : vector<8x128xf32>
    %c0_7 = arith.constant 0 : index
    %c0_8 = arith.constant 0 : index
    %31 = vector.load %arg3[%c0_7, %c0_8] : memref<4x128xf32, #tpu.memory_space<vmem>>, vector<1x128xf32>
    %32 = vector.broadcast %31 : vector<1x128xf32> to vector<8x128xf32>
    %33 = arith.addf %30, %32 : vector<8x128xf32>
    %c0_9 = arith.constant 0 : index
    %c0_10 = arith.constant 0 : index
    %34 = vector.load %arg4[%c0_9, %c0_10] : memref<5x128xf32, #tpu.memory_space<vmem>>, vector<1x128xf32>
    %35 = vector.shape_cast %34 : vector<1x128xf32> to vector<1x128xf32>
    %36 = vector.broadcast %35 : vector<1x128xf32> to vector<8x128xf32>
    %c1_11 = arith.constant 1 : index
    %c0_12 = arith.constant 0 : index
    %37 = vector.load %arg4[%c1_11, %c0_12] : memref<5x128xf32, #tpu.memory_space<vmem>>, vector<1x128xf32>
    %38 = vector.shape_cast %37 : vector<1x128xf32> to vector<1x128xf32>
    %39 = vector.broadcast %38 : vector<1x128xf32> to vector<8x128xf32>
    %cst_13 = arith.constant 5.000000e-01 : f32
    %40 = vector.broadcast %cst_13 : f32 to vector<8x128xf32>
    %41 = arith.cmpf ogt, %39, %40 : vector<8x128xf32>
    %c2_14 = arith.constant 2 : index
    %c0_15 = arith.constant 0 : index
    %42 = vector.load %arg4[%c2_14, %c0_15] : memref<5x128xf32, #tpu.memory_space<vmem>>, vector<1x128xf32>
    %43 = vector.broadcast %42 : vector<1x128xf32> to vector<8x128xf32>
    %44 = arith.mulf %18, %43 : vector<8x128xf32>
    %45 = arith.select %41, %15, %17 : vector<8x128xi1>, vector<8x128xf32>
    %46 = arith.mulf %44, %45 : vector<8x128xf32>
    %47 = arith.addf %36, %46 : vector<8x128xf32>
    %48 = arith.mulf %15, %15 : vector<8x128xf32>
    %49 = arith.mulf %17, %17 : vector<8x128xf32>
    %50 = arith.subf %48, %49 : vector<8x128xf32>
    %51 = arith.mulf %17, %15 : vector<8x128xf32>
    %52 = arith.mulf %15, %17 : vector<8x128xf32>
    %53 = arith.addf %51, %52 : vector<8x128xf32>
    %54 = arith.mulf %18, %18 : vector<8x128xf32>
    %c3_16 = arith.constant 3 : index
    %c0_17 = arith.constant 0 : index
    %55 = vector.load %arg4[%c3_16, %c0_17] : memref<5x128xf32, #tpu.memory_space<vmem>>, vector<1x128xf32>
    %56 = vector.broadcast %55 : vector<1x128xf32> to vector<8x128xf32>
    %57 = arith.mulf %54, %56 : vector<8x128xf32>
    %58 = arith.select %41, %50, %53 : vector<8x128xi1>, vector<8x128xf32>
    %59 = arith.mulf %57, %58 : vector<8x128xf32>
    %60 = arith.addf %47, %59 : vector<8x128xf32>
    %61 = arith.mulf %50, %15 : vector<8x128xf32>
    %62 = arith.mulf %53, %17 : vector<8x128xf32>
    %63 = arith.subf %61, %62 : vector<8x128xf32>
    %64 = arith.mulf %53, %15 : vector<8x128xf32>
    %65 = arith.mulf %50, %17 : vector<8x128xf32>
    %66 = arith.addf %64, %65 : vector<8x128xf32>
    %67 = arith.mulf %54, %18 : vector<8x128xf32>
    %c4 = arith.constant 4 : index
    %c0_18 = arith.constant 0 : index
    %68 = vector.load %arg4[%c4, %c0_18] : memref<5x128xf32, #tpu.memory_space<vmem>>, vector<1x128xf32>
    %69 = vector.broadcast %68 : vector<1x128xf32> to vector<8x128xf32>
    %70 = arith.mulf %67, %69 : vector<8x128xf32>
    %71 = arith.select %41, %63, %66 : vector<8x128xi1>, vector<8x128xf32>
    %72 = arith.mulf %70, %71 : vector<8x128xf32>
    %73 = arith.addf %60, %72 : vector<8x128xf32>
    %74 = arith.mulf %33, %73 : vector<8x128xf32>
    %c0_19 = arith.constant 0 : index
    %c0_20 = arith.constant 0 : index
    %75 = vector.load %arg5[%c0_19, %c0_20] : memref<8x128xf32, #tpu.memory_space<vmem>>, vector<8x128xf32>
    tpu.vector_store %arg5[%c0_19, %c0_20], %74 {strides = array<i32>} : memref<8x128xf32, #tpu.memory_space<vmem>>, vector<8x128xf32>,
    return
  }
  func.func @transform_0(%arg0: i32) -> (i32, i32) {
    %c0_i32 = arith.constant 0 : i32
    %c0_i32_0 = arith.constant 0 : i32
    return %arg0, %c0_i32 : i32, i32
  }
  func.func @transform_1(%arg0: i32) -> (i32, i32) {
    %c0_i32 = arith.constant 0 : i32
    %c0_i32_0 = arith.constant 0 : i32
    %c0_i32_1 = arith.constant 0 : i32
    return %c0_i32, %c0_i32_0 : i32, i32
  }
  func.func @transform_2(%arg0: i32) -> (i32, i32) {
    %c0_i32 = arith.constant 0 : i32
    %c0_i32_0 = arith.constant 0 : i32
    %c0_i32_1 = arith.constant 0 : i32
    return %c0_i32, %c0_i32_0 : i32, i32
  }
  func.func @transform_3(%arg0: i32) -> (i32, i32) {
    %c0_i32 = arith.constant 0 : i32
    %c0_i32_0 = arith.constant 0 : i32
    %c0_i32_1 = arith.constant 0 : i32
    return %c0_i32, %c0_i32_0 : i32, i32
  }
  func.func @transform_4(%arg0: i32) -> (i32, i32) {
    %c0_i32 = arith.constant 0 : i32
    %c0_i32_0 = arith.constant 0 : i32
    return %arg0, %c0_i32 : i32, i32
  }
}

</mosaic_0001>

<llo_original>
// kernel: tpu_custom_call.1
$region0: #{tpu_custom_call.1}
  #allocation0 [shape = 'u32[]', space=smem, size = 0x4, offset = 0x4, fixed_abs, tag = 'smem constant byte address 0x4 - core index']
  #allocation1 [shape = 'u32[144,128]{1,0:T(1,128)}', space=vmem, size = 0x12000, scoped, tag = 'internal scratch']
  %s0 = inlined_call_operand.hbm [shape: f32[8,16], index: 0, kind: input, shape index: {}]
  %s1 = inlined_call_operand.hbm [shape: bf16[96,512], index: 1, kind: input, shape index: {}]
  %s2 = inlined_call_operand.hbm [shape: f32[4,128], index: 2, kind: input, shape index: {}]
  %s3 = inlined_call_operand.vmem [shape: f32[5,128], index: 3, kind: input, shape index: {}]
  %s4 = inlined_call_operand.hbm [shape: f32[8,128], index: 4, kind: output, shape index: {}]
  %s5 = sld [smem:[#allocation0]]
  $region38: #{tpu_custom_call.1} parent=0
    _
  %s7 = ssub.s32 1, %s5
  %s8 = scalar_select 0, %s7, %s5
  $region1: #{tpu_custom_call.1} parent=0
    #allocation2 [shape = 'u8[4096]{0}', space=vmem, size = 0x1000, scoped, tag = 'input window, operand 0, single buffered']
    #allocation3 [shape = 's32[1]{0}', space=sflag, size = 0x4, scoped, tag = 'scoped memory for tpu_custom_call.1']
    #allocation4 [shape = 's32[1]{0}', space=sflag, size = 0x4, scoped, tag = 'scoped memory for tpu_custom_call.1']
    #allocation5 [shape = 'u8[98304]{0}', space=vmem, size = 0x18000, scoped, tag = 'input window, operand 1, single buffered']
    #allocation6 [shape = 's32[1]{0}', space=sflag, size = 0x4, scoped, tag = 'scoped memory for tpu_custom_call.1']
    #allocation7 [shape = 'u8[2048]{0}', space=vmem, size = 0x800, scoped, tag = 'input window, operand 2, single buffered']
    #allocation8 [shape = 'u8[4096]{0}', space=vmem, size = 0x1000, scoped, tag = 'output window, operand 0, single buffered']
    %9 = vsyncpa [#allocation3], 0
    %10 = vsyncpa [#allocation6], 0
    %11 = vsyncpa [#allocation4], 0
    // Predicated region
    $region2: #{tpu_custom_call.1} parent=1 // pred_check
      _
    $region3: #{tpu_custom_call.1} parent=1 // pred_check_branch
      %13 = sbr.rel (0) target = $region5
    $region4: #{tpu_custom_call.1} parent=1 // pred_region
      %s15 = ssub.s32 128, 128
      %16 = vsyncadd [#allocation3], %s15
      %s18 = sshll.u32 [#allocation2], 4
      %s19 = int_to_ptr.vmem [resolvable:$true] %s18
      %21 = dma.hbm_to_vmem [thread:$0]  %s0, 128, %s19, [#allocation3]
    $region5: #{tpu_custom_call.1} parent=1 // pred_fallthru
      _
    // Predicated region
    $region6: #{tpu_custom_call.1} parent=1 // pred_check
      _
    $region7: #{tpu_custom_call.1} parent=1 // pred_check_branch
      %23 = sbr.rel (0) target = $region9
    $region8: #{tpu_custom_call.1} parent=1 // pred_region
      %s25 = ssub.s32 3072, 3072
      %26 = vsyncadd [#allocation6], %s25
      %s27 = sshll.u32 [#allocation5], 4
      %s28 = int_to_ptr.vmem [resolvable:$true] %s27
      %33 = dma.hbm_to_vmem [thread:$0]  %s1, 3072, %s28, [#allocation6], 256, 256, 16
    $region9: #{tpu_custom_call.1} parent=1 // pred_fallthru
      _
    // Predicated region
    $region10: #{tpu_custom_call.1} parent=1 // pred_check
      _
    $region11: #{tpu_custom_call.1} parent=1 // pred_check_branch
      %35 = sbr.rel (0) target = $region13
    $region12: #{tpu_custom_call.1} parent=1 // pred_region
      %s37 = ssub.s32 64, 64
      %38 = vsyncadd [#allocation6], %s37
      %s40 = sshll.u32 [#allocation7], 4
      %s41 = int_to_ptr.vmem [resolvable:$true] %s40
      %43 = dma.hbm_to_vmem [thread:$0]  %s2, 64, %s41, [#allocation6]
    $region13: #{tpu_custom_call.1} parent=1 // pred_fallthru
      _
    // Predicated region
    $region14: #{tpu_custom_call.1} parent=1 // pred_check
      _
    $region15: #{tpu_custom_call.1} parent=1 // pred_check_branch
      %45 = sbr.rel (0) target = $region17
    $region16: #{tpu_custom_call.1} parent=1 // pred_region
      _
    $region17: #{tpu_custom_call.1} parent=1 // pred_fallthru
      _
    // Predicated region
    $region18: #{tpu_custom_call.1} parent=1 // pred_check
      _
    $region19: #{tpu_custom_call.1} parent=1 // pred_check_branch
      %47 = sbr.rel (0) target = $region21
    $region20: #{tpu_custom_call.1} parent=1 // pred_region
      %48 = dma.done [#allocation3], 128
    $region21: #{tpu_custom_call.1} parent=1 // pred_fallthru
      _
    // Predicated region
    $region22: #{tpu_custom_call.1} parent=1 // pred_check
      _
    $region23: #{tpu_custom_call.1} parent=1 // pred_check_branch
      %50 = sbr.rel (0) target = $region25
    $region24: #{tpu_custom_call.1} parent=1 // pred_region
      %51 = dma.done [#allocation6], 3072
    $region25: #{tpu_custom_call.1} parent=1 // pred_fallthru
      _
    // Predicated region
    $region26: #{tpu_custom_call.1} parent=1 // pred_check
      _
    $region27: #{tpu_custom_call.1} parent=1 // pred_check_branch
      %53 = sbr.rel (0) target = $region29
    $region28: #{tpu_custom_call.1} parent=1 // pred_region
      %54 = dma.done [#allocation6], 64
    $region29: #{tpu_custom_call.1} parent=1 // pred_fallthru
      _
    %v56 = vld [vmem:[#allocation2] sm:$0xff]
    %v57 = vsub.f32 %v56, 1.5707964
    %59 = vrot.lane.b32.xlu0 %v57, 16
    %v60 = vpop.permute.xlu0 %59
    %vm62 = vcmask 130048
    %v63 = vsel %vm62, %v56, %v60
    %v64 = vand.u32 2147483647, %v63
    %vm65 = vcmp.le.f32.partialorder %v64, 0.7853982
    %vm66 = vcmp.lt.s32.totalorder %v63, 0
    %v67 = vand.u32 %v63, 2139095040
    %v68 = vshrl.u32 %v67, 23
    %v69 = vsub.s32 %v68, 127
    %v70 = vand.u32 2147483647, %v63
    %v71 = vand.u32 %v70, 8388607
    %v72 = vor.u32 %v71, 8388608
    %v73 = vsub.s32 0, %v72
    %v74 = vadd.s32 %v69, 1
    %vm75 = vcmp.gt.s32.totalorder %v74, 0
    %v76 = vsel %vm75, %v74, 0
    %v77 = vshrl.u32 %v76, 5
    %v78 = vand.u32 %v76, 31
    %v79 = vsub.s32 32, %v78
    %v80 = vshrl.u32 683565275, %v79
    %v81 = vshll.u32 683565275, %v78
    %v82 = vshrl.u32 2475754826, %v79
    %v83 = vor.u32 %v81, %v82
    %v84 = vshll.u32 2475754826, %v78
    %v85 = vshrl.u32 2131351028, %v79
    %v86 = vor.u32 %v84, %v85
    %v87 = vshll.u32 2131351028, %v78
    %v88 = vshrl.u32 2102212464, %v79
    %v89 = vor.u32 %v87, %v88
    %v90 = vshll.u32 2102212464, %v78
    %v91 = vshrl.u32 920167782, %v79
    %v92 = vor.u32 %v90, %v91
    %v93 = vshll.u32 920167782, %v78
    %v94 = vshrl.u32 1326507024, %v79
    %v95 = vor.u32 %v93, %v94
    %vm96 = vcmp.lt.s32.totalorder %v77, 1
    %vm97 = vcmp.lt.s32.totalorder %v77, 2
    %vm98 = vcmp.lt.s32.totalorder %v77, 3
    %vm99 = vcmp.lt.s32.totalorder %v77, 4
    %v100 = vsel %vm96, %v80, %v83
    %v101 = vsel %vm99, %v89, 2102212464
    %v102 = vsel %vm98, %v86, %v101
    %v103 = vsel %vm97, %v100, %v102
    %v104 = vsel %vm96, %v83, %v86
    %v105 = vsel %vm99, %v92, 920167782
    %v106 = vsel %vm98, %v89, %v105
    %v107 = vsel %vm97, %v104, %v106
    %v108 = vsel %vm96, %v86, %v89
    %v109 = vsel %vm99, %v95, 1326507024
    %v110 = vsel %vm98, %v92, %v109
    %v111 = vsel %vm97, %v108, %v110
    %v112 = vshll.u32 %v72, 8
    %v113 = vmul.u32.u64.compose %v112, %v111
    %v114 = vextract.low.u32 %v113
    %v115 = vextract.high.u32 %v113
    %v116 = vmul.u32.u64.compose %v112, %v107
    %v117 = vextract.low.u32 %v116
    %v118 = vextract.high.u32 %v116
    %v119 = vmul.u32 %v112, %v103
    %v120 = vadd.s32 %v115, %v117
    %vm121 = vc.u32 %v115, %v117
    %v122 = vadd.s32 %v118, 1
    %v123 = vsel %vm121, %v122, %v118
    %v124 = vadd.s32 %v119, %v123
    %v125 = vadd.s32 %v124, 536870912
    %v126 = vshrl.u32 %v125, 30
    %v127 = vshll.u32 %v126, 30
    %v128 = vsub.s32 %v124, %v127
    %vm129 = vcmp.lt.s32.totalorder %v128, 0
    %v130 = vsub.s32 0, %v128
    %v131 = vsel %vm129, %v130, %v128
    %v132 = vclz %v131
    %v133 = vsub.s32 %v132, 2
    %vm134 = vcmp.gt.s32.totalorder 0, %v133
    %v135 = vsel %vm134, 0, %v133
    %v136 = vsub.s32 32, %v135
    %v137 = vshll.u32 %v128, %v135
    %v138 = vshrl.u32 %v120, %v136
    %v139 = vor.u32 %v137, %v138
    %v140 = vsub.s32 4294967266, %v135
    %v141 = vadd.s32 %v140, 127
    %v142 = vshll.u32 %v141, 23
    %v143 = vor.u32 4788187, %v142
    %v144 = vand.u32 2147483647, %v143
    %v146 = vcvt.s32.f32 %v139
    %v147 = vmul.f32 %v146, %v144
    %v148 = vxor.u32 %v147, 2147483648
    %v149 = vsel %vm66, %v148, %v147
    %v150 = vsub.s32 4, %v126
    %v151 = vsel %vm66, %v150, %v126
    %v152 = vsel %vm65, %v63, %v149
    %v153 = vsel %vm65, 0, %v151
    %v154 = vcosq.f32.pop %v152
    %v155 = vsinq.f32.pop %v152
    %vm156 = vweird.f32 %v63
    %v157 = vand.u32 %v153, 3
    %vm158 = vcmp.lt.s32.totalorder %v157, 2
    %vm159 = vcmp.eq.s32.totalorder %v157, 0
    %v160 = vxor.u32 %v155, 2147483648
    %v161 = vsel %vm159, %v154, %v160
    %vm162 = vcmp.eq.s32.totalorder %v157, 2
    %v163 = vxor.u32 %v154, 2147483648
    %v164 = vsel %vm162, %v163, %v155
    %v165 = vsel %vm158, %v161, %v164
    %v166 = vsel %vm156, nan, %v165
    %v167 = vpack.c.bf16 %v166, %v166
    %v168 = vunpack.c.l.bf16 %v167
    %v169 = vsub.f32 %v166, %v168
    %v170 = vpack.c.bf16 %v169, %v169
    %v171 = vunpack.c.l.bf16 %v170
    %v172 = vsub.f32 %v169, %v171
    %174 = vrot.lane.b32.xlu0 %v169, 32
    %v175 = vpop.permute.xlu0 %174
    %178 = vrot.lane.b32.xlu0 %v172, 64
    %v179 = vpop.permute.xlu0 %178
    %vm181 = vcmask 261120
    %v182 = vsel %vm181, %v166, %v175
    %vm183 = vcmask 523264
    %v184 = vsel %vm183, %v182, %v179
    %v185 = vpack.c.bf16 %v184, %v184
    %v186 = vld [vmem:[#allocation5] sm:$0xff]
    %v187 = vld [vmem:[#allocation5 + $0x8] sm:$0xff]
    %v188 = vld [vmem:[#allocation5 + $0x10] sm:$0xff]
    %v189 = vld [vmem:[#allocation5 + $0x18] sm:$0xff]
    %v190 = vld [vmem:[#allocation5 + $0x20] sm:$0xff]
    %v191 = vld [vmem:[#allocation5 + $0x28] sm:$0xff]
    %v192 = vld [vmem:[#allocation5 + $0x30] sm:$0xff]
    %v193 = vld [vmem:[#allocation5 + $0x38] sm:$0xff]
    %v194 = vld [vmem:[#allocation5 + $0x40] sm:$0xff]
    %v195 = vld [vmem:[#allocation5 + $0x48] sm:$0xff]
    %v196 = vld [vmem:[#allocation5 + $0x50] sm:$0xff]
    %v197 = vld [vmem:[#allocation5 + $0x58] sm:$0xff]
    %v198 = vld [vmem:[#allocation5 + $0x60] sm:$0xff]
    %v199 = vld [vmem:[#allocation5 + $0x68] sm:$0xff]
    %v200 = vld [vmem:[#allocation5 + $0x70] sm:$0xff]
    %v201 = vld [vmem:[#allocation5 + $0x78] sm:$0xff]
    %v202 = vld [vmem:[#allocation5 + $0x80] sm:$0xff]
    %v203 = vld [vmem:[#allocation5 + $0x88] sm:$0xff]
    %v204 = vld [vmem:[#allocation5 + $0x90] sm:$0xff]
    %v205 = vld [vmem:[#allocation5 + $0x98] sm:$0xff]
    %v206 = vld [vmem:[#allocation5 + $0xa0] sm:$0xff]
    %v207 = vld [vmem:[#allocation5 + $0xa8] sm:$0xff]
    %v208 = vld [vmem:[#allocation5 + $0xb0] sm:$0xff]
    %v209 = vld [vmem:[#allocation5 + $0xb8] sm:$0xff]
    %v234 = vunpack.c.l.b16 %v186
    %v235 = vunpack.c.h.b16 %v186
    %v236 = vunpack.c.l.b16 %v187
    %v237 = vunpack.c.h.b16 %v187
    %v238 = vunpack.c.l.b16 %v188
    %v239 = vunpack.c.h.b16 %v188
    %v240 = vunpack.c.l.b16 %v189
    %v241 = vunpack.c.h.b16 %v189
    %v242 = vunpack.c.l.b16 %v190
    %v243 = vunpack.c.h.b16 %v190
    %v244 = vunpack.c.l.b16 %v191
    %v245 = vunpack.c.h.b16 %v191
    %v246 = vunpack.c.l.b16 %v192
    %v247 = vunpack.c.h.b16 %v192
    %v248 = vunpack.c.l.b16 %v193
    %v249 = vunpack.c.h.b16 %v193
    %v250 = vunpack.c.l.b16 %v194
    %v251 = vunpack.c.h.b16 %v194
    %v252 = vunpack.c.l.b16 %v195
    %v253 = vunpack.c.h.b16 %v195
    %v254 = vunpack.c.l.b16 %v196
    %v255 = vunpack.c.h.b16 %v196
    %v256 = vunpack.c.l.b16 %v197
    %v257 = vunpack.c.h.b16 %v197
    %v258 = vunpack.c.l.b16 %v198
    %v259 = vunpack.c.h.b16 %v198
    %v260 = vunpack.c.l.b16 %v199
    %v261 = vunpack.c.h.b16 %v199
    %v262 = vunpack.c.l.b16 %v200
    %v263 = vunpack.c.h.b16 %v200
    %v264 = vunpack.c.l.b16 %v201
    %v265 = vunpack.c.h.b16 %v201
    %v266 = vunpack.c.l.b16 %v202
    %v267 = vunpack.c.h.b16 %v202
    %v268 = vunpack.c.l.b16 %v203
    %v269 = vunpack.c.h.b16 %v203
    %v270 = vunpack.c.l.b16 %v204
    %v271 = vunpack.c.h.b16 %v204
    %v272 = vunpack.c.l.b16 %v205
    %v273 = vunpack.c.h.b16 %v205
    %v274 = vunpack.c.l.b16 %v206
    %v275 = vunpack.c.h.b16 %v206
    %v276 = vunpack.c.l.b16 %v207
    %v277 = vunpack.c.h.b16 %v207
    %v278 = vunpack.c.l.b16 %v208
    %v279 = vunpack.c.h.b16 %v208
    %v280 = vunpack.c.l.b16 %v209
    %v281 = vunpack.c.h.b16 %v209
    %v282 = vpack.c.b16 %v238, %v234
    %v283 = vpack.c.b16 %v239, %v235
    %v284 = vpack.c.b16 %v240, %v236
    %v285 = vpack.c.b16 %v241, %v237
    %v286 = vpack.c.b16 %v246, %v242
    %v287 = vpack.c.b16 %v247, %v243
    %v288 = vpack.c.b16 %v248, %v244
    %v289 = vpack.c.b16 %v249, %v245
    %v290 = vpack.c.b16 %v254, %v250
    %v291 = vpack.c.b16 %v255, %v251
    %v292 = vpack.c.b16 %v256, %v252
    %v293 = vpack.c.b16 %v257, %v253
    %v294 = vpack.c.b16 %v262, %v258
    %v295 = vpack.c.b16 %v263, %v259
    %v296 = vpack.c.b16 %v264, %v260
    %v297 = vpack.c.b16 %v265, %v261
    %v298 = vpack.c.b16 %v270, %v266
    %v299 = vpack.c.b16 %v271, %v267
    %v300 = vpack.c.b16 %v272, %v268
    %v301 = vpack.c.b16 %v273, %v269
    %v302 = vpack.c.b16 %v278, %v274
    %v303 = vpack.c.b16 %v279, %v275
    %v304 = vpack.c.b16 %v280, %v276
    %v305 = vpack.c.b16 %v281, %v277
    %vm330 = vcmask 785408
    %v332 = vsel %vm330, %v185, 0
    %334 = vmatprep.subr.bf16.mxu0 %v283
    %335 = vmatpush1.bf16.msra.mxu0 %v282
    %336 = vmatprep.subr.bf16.mxu0 %v287
    %337 = vmatpush1.bf16.msra.mxu0 %v286
    %338 = vmatprep.subr.bf16.mxu0 %v291
    %339 = vmatpush1.bf16.msra.mxu0 %v290
    %340 = vmatprep.subr.bf16.mxu0 %v295
    %341 = vmatpush1.bf16.msra.mxu0 %v294
    %342 = vmatprep.subr.bf16.mxu0 %v299
    %343 = vmatpush1.bf16.msra.mxu0 %v298
    %344 = vmatprep.subr.bf16.mxu0 %v303
    %345 = vmatpush1.bf16.msra.mxu0 %v302
    %346 = vmatprep.subr.bf16.mxu0 0
    %347 = vmatpush1.bf16.msra.mxu0 0
    %348 = vmatprep.subr.bf16.mxu0 0
    %349 = vmatpush1.bf16.msra.mxu0 0
    %350 = vmatprep.subr.bf16.mxu0 0
    %351 = vmatpush1.bf16.msra.mxu0 0
    %352 = vmatprep.subr.bf16.mxu0 0
    %353 = vmatpush1.bf16.msra.mxu0 0
    %354 = vmatprep.subr.bf16.mxu0 0
    %355 = vmatpush1.bf16.msra.mxu0 0
    %356 = vmatprep.subr.bf16.mxu0 0
    %357 = vmatpush1.bf16.msra.mxu0 0
    %358 = vmatprep.subr.bf16.mxu0 0
    %359 = vmatpush1.bf16.msra.mxu0 0
    %360 = vmatprep.subr.bf16.mxu0 0
    %361 = vmatpush1.bf16.msra.mxu0 0
    %362 = vmatprep.subr.bf16.mxu0 0
    %363 = vmatpush1.bf16.msra.mxu0 0
    %364 = vmatprep.subr.bf16.mxu0 0
    %365 = vmatpush1.bf16.msra.mxu0 0
    %366 = vmatprep.mubr.bf16.mxu0 0
    %367 = vmatmul.mubr.bf16.gmra.mrb[0].mxu0 %v332
    %v368 = vpop.f32.mrb[0].mxu0
    %v369 = vadd.f32 0.0, %v368
    %v370 = vpop.f32.mrb[0].mxu0
    %v371 = vadd.f32 0.0, %v370
    %v372 = vpop.f32.mrb[0].mxu0
    %v373 = vpop.f32.mrb[0].mxu0
    %374 = vdwg.mxu0
    %375 = vmatprep.subr.bf16.mxu0 %v285
    %376 = vmatpush1.bf16.msra.mxu0 %v284
    %377 = vmatprep.subr.bf16.mxu0 %v289
    %378 = vmatpush1.bf16.msra.mxu0 %v288
    %379 = vmatprep.subr.bf16.mxu0 %v293
    %380 = vmatpush1.bf16.msra.mxu0 %v292
    %381 = vmatprep.subr.bf16.mxu0 %v297
    %382 = vmatpush1.bf16.msra.mxu0 %v296
    %383 = vmatprep.subr.bf16.mxu0 %v301
    %384 = vmatpush1.bf16.msra.mxu0 %v300
    %385 = vmatprep.subr.bf16.mxu0 %v305
    %386 = vmatpush1.bf16.msra.mxu0 %v304
    %387 = vmatprep.subr.bf16.mxu0 0
    %388 = vmatpush1.bf16.msra.mxu0 0
    %389 = vmatprep.subr.bf16.mxu0 0
    %390 = vmatpush1.bf16.msra.mxu0 0
    %391 = vmatprep.subr.bf16.mxu0 0
    %392 = vmatpush1.bf16.msra.mxu0 0
    %393 = vmatprep.subr.bf16.mxu0 0
    %394 = vmatpush1.bf16.msra.mxu0 0
    %395 = vmatprep.subr.bf16.mxu0 0
    %396 = vmatpush1.bf16.msra.mxu0 0
    %397 = vmatprep.subr.bf16.mxu0 0
    %398 = vmatpush1.bf16.msra.mxu0 0
    %399 = vmatprep.subr.bf16.mxu0 0
    %400 = vmatpush1.bf16.msra.mxu0 0
    %401 = vmatprep.subr.bf16.mxu0 0
    %402 = vmatpush1.bf16.msra.mxu0 0
    %403 = vmatprep.subr.bf16.mxu0 0
    %404 = vmatpush1.bf16.msra.mxu0 0
    %405 = vmatprep.subr.bf16.mxu0 0
    %406 = vmatpush1.bf16.msra.mxu0 0
    %407 = vmatprep.mubr.bf16.mxu0 0
    %408 = vmatmul.mubr.bf16.gmra.mrb[0].mxu0 %v332
    %v409 = vpop.f32.mrb[0].mxu0
    %v410 = vadd.f32 0.0, %v409
    %v411 = vpop.f32.mrb[0].mxu0
    %v412 = vadd.f32 0.0, %v411
    %v413 = vpop.f32.mrb[0].mxu0
    %v414 = vpop.f32.mrb[0].mxu0
    %415 = vdwg.mxu0
    %v416 = vld [vmem:[#allocation7 + $0x3] sm:$0x1]
    %v417 = vlaneseq
    %v418 = vshrl.u32 %v417, 7
    %v419 = vsub.s32 0, %v418
    %v420 = vrot.slane %v416, %v419
    %v421 = vmul.f32 %v420, %v371
    %v422 = vld [vmem:[#allocation7 + $0x2] sm:$0x1]
    %v423 = vlaneseq
    %v424 = vshrl.u32 %v423, 7
    %v425 = vsub.s32 0, %v424
    %v426 = vrot.slane %v422, %v425
    %v427 = vadd.f32 %v421, %v426
    %v428 = vmul.f32 %v427, %v371
    %v429 = vld [vmem:[#allocation7 + $0x1] sm:$0x1]
    %v430 = vlaneseq
    %v431 = vshrl.u32 %v430, 7
    %v432 = vsub.s32 0, %v431
    %v433 = vrot.slane %v429, %v432
    %v434 = vadd.f32 %v428, %v433
    %v435 = vmul.f32 %v434, %v371
    %v436 = vld [vmem:[#allocation7] sm:$0x1]
    %v437 = vlaneseq
    %v438 = vshrl.u32 %v437, 7
    %v439 = vsub.s32 0, %v438
    %v440 = vrot.slane %v436, %v439
    %v441 = vadd.f32 %v435, %v440
    %v442 = vld [vmem:[%s3] sm:$0x1]
    %v443 = vlaneseq
    %v444 = vshrl.u32 %v443, 7
    %v445 = vsub.s32 0, %v444
    %v446 = vrot.slane %v442, %v445
    %v447 = vld [vmem:[%s3 + $0x1] sm:$0x1]
    %v448 = vlaneseq
    %v449 = vshrl.u32 %v448, 7
    %v450 = vsub.s32 0, %v449
    %v451 = vrot.slane %v447, %v450
    %vm452 = vcmp.gt.f32.partialorder %v451, 0.5
    %v453 = vld [vmem:[%s3 + $0x2] sm:$0x1]
    %v454 = vlaneseq
    %v455 = vshrl.u32 %v454, 7
    %v456 = vsub.s32 0, %v455
    %v457 = vrot.slane %v453, %v456
    %v458 = vmul.f32 %v412, %v457
    %v459 = vsel %vm452, %v369, %v410
    %v460 = vmul.f32 %v458, %v459
    %v461 = vadd.f32 %v446, %v460
    %v462 = vmul.f32 %v369, %v369
    %v463 = vmul.f32 %v410, %v410
    %v464 = vsub.f32 %v462, %v463
    %v465 = vmul.f32 %v410, %v369
    %v466 = vadd.f32 %v465, %v465
    %v467 = vmul.f32 %v412, %v412
    %v468 = vld [vmem:[%s3 + $0x3] sm:$0x1]
    %v469 = vlaneseq
    %v470 = vshrl.u32 %v469, 7
    %v471 = vsub.s32 0, %v470
    %v472 = vrot.slane %v468, %v471
    %v473 = vmul.f32 %v467, %v472
    %v474 = vsel %vm452, %v464, %v466
    %v475 = vmul.f32 %v473, %v474
    %v476 = vadd.f32 %v461, %v475
    %v477 = vmul.f32 %v464, %v369
    %v478 = vmul.f32 %v466, %v410
    %v479 = vsub.f32 %v477, %v478
    %v480 = vmul.f32 %v466, %v369
    %v481 = vmul.f32 %v464, %v410
    %v482 = vadd.f32 %v480, %v481
    %v483 = vmul.f32 %v467, %v412
    %v484 = vld [vmem:[%s3 + $0x4] sm:$0x1]
    %v485 = vlaneseq
    %v486 = vshrl.u32 %v485, 7
    %v487 = vsub.s32 0, %v486
    %v488 = vrot.slane %v484, %v487
    %v489 = vmul.f32 %v483, %v488
    %v490 = vsel %vm452, %v479, %v482
    %v491 = vmul.f32 %v489, %v490
    %v492 = vadd.f32 %v476, %v491
    %v493 = vmul.f32 %v441, %v492
    %494 = vst [vmem:[#allocation8] sm:$0xff] %v493
    // Predicated region
    $region30: #{tpu_custom_call.1} parent=1 // pred_check
      _
    $region31: #{tpu_custom_call.1} parent=1 // pred_check_branch
      %496 = sbr.rel (0) target = $region33
    $region32: #{tpu_custom_call.1} parent=1 // pred_region
      %s498 = ssub.s32 128, 128
      %499 = vsyncadd [#allocation4], %s498
      %s501 = sshll.u32 [#allocation8], 4
      %s502 = int_to_ptr.vmem [resolvable:$true] %s501
      %504 = dma.vmem_to_hbm [thread:$0]  %s502, 128, %s4, [#allocation4]
    $region33: #{tpu_custom_call.1} parent=1 // pred_fallthru
      _
    // Predicated region
    $region34: #{tpu_custom_call.1} parent=1 // pred_check
      _
    $region35: #{tpu_custom_call.1} parent=1 // pred_check_branch
      %506 = sbr.rel (0) target = $region37
    $region36: #{tpu_custom_call.1} parent=1 // pred_region
      %507 = dma.done [#allocation4], 128
    $region37: #{tpu_custom_call.1} parent=1 // pred_fallthru
      _
    %508 = vsyncpa [#allocation3], 1
    %509 = vsyncpa [#allocation6], 1
    %510 = vsyncpa [#allocation4], 1

</llo_original>
